<compile_context>
chip_gen: v7x
topology: tpu7x:2x2x1
jax: 0.10.0
libtpu: 0.0.40
codegen_flags: <defaults>
</compile_context>

<pallas_src>
import numpy as np
import jax
import jax.numpy as jnp
from jax import lax
from jax.experimental import pallas as pl
from jax.experimental.pallas import tpu as pltpu

NEG = -1.0e30     # finite stand-in for -inf (exp underflows to 0, no NaNs in LSE)
B_TILE = 16       # samples per grid step -> (16,128) = 2 vregs per op in the recurrence
LANE = 128


def _ctc_kernel(inlen_ref,    # SMEM (N_pad,) int32   scalar-prefetched input lengths
                lpe_ref,      # VMEM (T, B_TILE, E)   pre-gathered log p(class == ext[s])
                skip_ref,     # VMEM (B_TILE, E)      0 where s-2 -> s transition allowed, NEG else
                init_ref,     # VMEM (B_TILE, E)      0 where alpha_0 allowed, NEG else
                final_ref,    # VMEM (B_TILE, E)      0 where final read positions, NEG else
                loss_ref):    # VMEM (B_TILE, LANE)   per-sample NLL (broadcast over lanes)
    T = lpe_ref.shape[0]
    B = lpe_ref.shape[1]
    E = lpe_ref.shape[2]
    base = pl.program_id(0) * B

    # Hoisted constants (broadcasts are NOT CSE'd by JAX -> keep them out of the loop).
    lane = lax.broadcasted_iota(jnp.int32, (B, E), 1)
    lane_ge1 = lane >= 1
    neg_fill = jnp.full((B, E), NEG, jnp.float32)
    sub = lax.broadcasted_iota(jnp.int32, (B, 1), 0)

    # Per-sample input lengths as a (B,1) column + tile-wide max loop bound (B SMEM reads,
    # done once per grid step, outside the time loop).
    ilen_col = jnp.zeros((B, 1), jnp.int32)
    t_max = jnp.int32(1)
    for i in range(B):
        li = inlen_ref[base + i]
        ilen_col = jnp.where(sub == i, li, ilen_col)
        t_max = jnp.maximum(t_max, li)
    t_max = jnp.minimum(t_max, T)   # never index lpe_ref out of bounds

    skip_pen = skip_ref[...]
    alpha0 = lpe_ref[0] + init_ref[...]   # NEG-additive masking == where(init_ok, lp0, NEG)

    def step(t, alpha):
        a0 = alpha
        a1 = jnp.where(lane_ge1, pltpu.roll(alpha, shift=1, axis=1), neg_fill)
        a2 = pltpu.roll(alpha, shift=2, axis=1) + skip_pen
        m = jnp.maximum(jnp.maximum(a0, a1), a2)
        lse = m + jnp.log(jnp.exp(a0 - m) + jnp.exp(a1 - m) + jnp.exp(a2 - m))
        new = lse + lpe_ref[t]
        # samples whose input ended keep their alpha frozen
        return jnp.where(t < ilen_col, new, alpha)

    alpha = lax.fori_loop(1, t_max, step, alpha0)

    # Final per-sample NLL: -logsumexp over {alpha[2*tlen], alpha[2*tlen-1]}
    masked = alpha + final_ref[...]
    m = jnp.max(masked, axis=-1, keepdims=True)
    nll = -(m + jnp.log(jnp.sum(jnp.exp(masked - m), axis=-1, keepdims=True)))
    loss_ref[...] = jnp.broadcast_to(nll, (B, loss_ref.shape[1]))


@jax.jit
def ctc_per_sample_loss(log_probs_tnc, targets, input_lengths, target_lengths):
    """Equivalent of nn.CTCLoss(reduction='none')(input, target, in_len, tgt_len)."""
    T, N, C = log_probs_tnc.shape
    S = targets.shape[1]
    E = ((2 * S + 1 + LANE - 1) // LANE) * LANE           # extended-label axis, lane-padded
    N_pad = ((N + B_TILE - 1) // B_TILE) * B_TILE
    pad_n = N_pad - N

    tgt = jnp.pad(targets.astype(jnp.int32), ((0, pad_n), (0, 0)))
    in_len = jnp.pad(input_lengths.astype(jnp.int32), (0, pad_n), constant_values=1)
    tgt_len = jnp.pad(target_lengths.astype(jnp.int32), (0, pad_n))
    logp = jnp.pad(log_probs_tnc.astype(jnp.float32), ((0, 0), (0, pad_n), (0, 0)))

    # Blank-interleaved extended labels: blank, t0, blank, t1, ..., blank ; 0 beyond 2*tlen.
    ext = jnp.zeros((N_pad, E), jnp.int32)
    ext = ext.at[:, 1:2 * S:2].set(tgt)

    lanes = jnp.arange(E, dtype=jnp.int32)[None, :]
    tlen_col = tgt_len[:, None]

    # skip transition (s-2 -> s) allowed iff label non-blank and != label at s-2
    ext_m2 = jnp.pad(ext, ((0, 0), (2, 0)))[:, :E]
    skip_pen = jnp.where((lanes >= 2) & (ext != 0) & (ext != ext_m2),
                         0.0, NEG).astype(jnp.float32)
    init_pen = jnp.where((lanes == 0) | ((lanes == 1) & (tlen_col > 0)),
                         0.0, NEG).astype(jnp.float32)
    final_pen = jnp.where((lanes == 2 * tlen_col) |
                          ((lanes == 2 * tlen_col - 1) & (tlen_col > 0)),
                          0.0, NEG).astype(jnp.float32)

    # Pre-gather log p(class == ext[s]) once in XLA: (T, N_pad, E).
    # This shrinks the kernel's DMA from T*C to T*E floats per sample and removes the
    # one-hot MXU pass from the kernel.
    lpe = jnp.take_along_axis(logp, jnp.broadcast_to(ext[None], (T, N_pad, E)), axis=2)

    # VMEM hint derived from the actual (double-buffered) working set.
    # TODO(synk): for very long T the (T, B_TILE, E) tile should be split over a second
    # ("arbitrary") grid axis with alpha carried in VMEM scratch; not needed at these shapes.
    tile_bytes = 4 * (T * B_TILE * E + 3 * B_TILE * E + B_TILE * LANE)
    vmem_limit = int(min(max(2 * tile_bytes + (4 << 20), 32 << 20), 64 << 20))

    grid_spec = pltpu.PrefetchScalarGridSpec(
        num_scalar_prefetch=1,
        grid=(N_pad // B_TILE,),
        in_specs=[
            pl.BlockSpec((T, B_TILE, E), lambda b, il: (0, b, 0)),
            pl.BlockSpec((B_TILE, E), lambda b, il: (b, 0)),
            pl.BlockSpec((B_TILE, E), lambda b, il: (b, 0)),
            pl.BlockSpec((B_TILE, E), lambda b, il: (b, 0)),
        ],
        out_specs=pl.BlockSpec((B_TILE, LANE), lambda b, il: (b, 0)),
    )
    out = pl.pallas_call(
        _ctc_kernel,
        out_shape=jax.ShapeDtypeStruct((N_pad, LANE), jnp.float32),
        grid_spec=grid_spec,
        compiler_params=pltpu.CompilerParams(
            dimension_semantics=("parallel",),     # independent samples -> 2 TCs on v7x
            vmem_limit_bytes=vmem_limit),
    )(in_len, lpe, skip_pen, init_pen, final_pen)
    return out[:N, 0]


@jax.jit
def squared_ctc_loss(log_probs, targets, input_lengths, target_lengths):
    per_sample = ctc_per_sample_loss(log_probs, targets, input_lengths, target_lengths)
    return jnp.mean(per_sample ** 2)


def _ctc_reference(log_probs, targets, input_lengths, target_lengths):
    """Pure numpy float64 reference of CTC NLL (blank = 0), reduction='none'."""
    lp = np.asarray(log_probs, dtype=np.float64)  # (T, N, C)
    out = []
    for b in range(lp.shape[1]):
        Tb = int(input_lengths[b]); Sb = int(target_lengths[b])
        tgt = [int(x) for x in np.asarray(targets[b][:Sb])]
        ext = [0]
        for c in tgt:
            ext += [c, 0]
        L = len(ext)
        alpha = np.full(L, -np.inf)
        alpha[0] = lp[0, b, 0]
        if L > 1:
            alpha[1] = lp[0, b, ext[1]]
        for t in range(1, Tb):
            new = np.full(L, -np.inf)
            for s in range(L):
                cands = [alpha[s]]
                if s >= 1:
                    cands.append(alpha[s - 1])
                if s >= 2 and ext[s] != 0 and ext[s] != ext[s - 2]:
                    cands.append(alpha[s - 2])
                m = max(cands)
                if m == -np.inf:
                    new[s] = -np.inf
                else:
                    new[s] = m + np.log(sum(np.exp(c - m) for c in cands)) + lp[t, b, ext[s]]
            alpha = new
        cands = [alpha[L - 1]] + ([alpha[L - 2]] if L >= 2 else [])
        m = max(cands)
        out.append(-(m + np.log(sum(np.exp(c - m) for c in cands))))
    return np.array(out)


if __name__ == "__main__":
    T, N, C, S = 16, 3, 32, 8
    key = jax.random.PRNGKey(0)
    k1, k2 = jax.random.split(key)
    logits = jax.random.normal(k1, (T, N, C), dtype=jnp.float32)
    log_probs = jax.nn.log_softmax(logits, axis=-1)          # CTC expects log-probs
    targets = jax.random.randint(k2, (N, S), 1, C, dtype=jnp.int32)
    input_lengths = jnp.array([16, 13, 9], dtype=jnp.int32)
    target_lengths = jnp.array([8, 5, 2], dtype=jnp.int32)

    per_sample = jax.block_until_ready(
        ctc_per_sample_loss(log_probs, targets, input_lengths, target_lengths))
    result = jax.block_until_ready(
        squared_ctc_loss(log_probs, targets, input_lengths, target_lengths))

    ref = _ctc_reference(np.asarray(log_probs), np.asarray(targets),
                         np.asarray(input_lengths), np.asarray(target_lengths))
    np.testing.assert_allclose(np.asarray(per_sample), ref, rtol=2e-3, atol=2e-3)
    np.testing.assert_allclose(float(result), float(np.mean(ref ** 2)),
                               rtol=2e-3, atol=2e-3)
    # TODO(synk): PyTorch returns +inf for infeasible alignments (zero_infinity=False);
    # this kernel returns ~1e30 per-sample, which still overflows to inf after squaring.
    print("KERNEL_OK")
</pallas_src>

<mosaic_0001>
module attributes {stable_mosaic.version = 11 : i64} {
  func.func @_ctc_kernel(%arg0: i32, %arg1: memref<16xi32, #tpu.memory_space<smem>>, %arg2: memref<16x16x128xf32, #tpu.memory_space<vmem>>, %arg3: memref<16x128xf32, #tpu.memory_space<vmem>>, %arg4: memref<16x128xf32, #tpu.memory_space<vmem>>, %arg5: memref<16x128xf32, #tpu.memory_space<vmem>>, %arg6: memref<16x128xf32, #tpu.memory_space<vmem>>) attributes {dimension_semantics = [#tpu.dimension_semantics<parallel>], iteration_bounds = array<i64: 1>, scalar_prefetch = 1 : i64, scratch_operands = 0 : i64, tpu.core_type = #tpu.core_type<tc>, window_params = [{transform_indices = @transform_0, window_bounds = array<i64: 16, 16, 128>}, {transform_indices = @transform_1, window_bounds = array<i64: 16, 128>}, {transform_indices = @transform_2, window_bounds = array<i64: 16, 128>}, {transform_indices = @transform_3, window_bounds = array<i64: 16, 128>}, {transform_indices = @transform_4, window_bounds = array<i64: 16, 128>}]} {
    %c16_i32 = arith.constant 16 : i32
    %0 = arith.muli %arg0, %c16_i32 : i32
    %1 = tpu.iota {dimensions = array<i32: 1>} : vector<16x128xi32>
    %c1_i32 = arith.constant 1 : i32
    %2 = vector.broadcast %c1_i32 : i32 to vector<16x128xi32>
    %3 = arith.cmpi sge, %1, %2 : vector<16x128xi32>
    %cst = arith.constant -1.000000e+30 : f32
    %4 = vector.broadcast %cst : f32 to vector<16x128xf32>
    %5 = tpu.iota {dimensions = array<i32: 0>} : vector<16x1xi32>
    %c0_i32 = arith.constant 0 : i32
    %6 = vector.broadcast %c0_i32 : i32 to vector<16x1xi32>
    %c0_i32_0 = arith.constant 0 : i32
    %7 = arith.addi %0, %c0_i32_0 : i32
    %8 = arith.index_cast %7 : i32 to index
    %9 = memref.load %arg1[%8] : memref<16xi32, #tpu.memory_space<smem>>
    %c0_i32_1 = arith.constant 0 : i32
    %10 = vector.broadcast %c0_i32_1 : i32 to vector<16x1xi32>
    %11 = arith.cmpi eq, %5, %10 : vector<16x1xi32>
    %12 = vector.broadcast %9 : i32 to vector<16x1xi32>
    %13 = arith.select %11, %12, %6 : vector<16x1xi1>, vector<16x1xi32>
    %c1_i32_2 = arith.constant 1 : i32
    %14 = arith.maxsi %c1_i32_2, %9 : i32
    %c1_i32_3 = arith.constant 1 : i32
    %15 = arith.addi %0, %c1_i32_3 : i32
    %16 = arith.index_cast %15 : i32 to index
    %17 = memref.load %arg1[%16] : memref<16xi32, #tpu.memory_space<smem>>
    %c1_i32_4 = arith.constant 1 : i32
    %18 = vector.broadcast %c1_i32_4 : i32 to vector<16x1xi32>
    %19 = arith.cmpi eq, %5, %18 : vector<16x1xi32>
    %20 = vector.broadcast %17 : i32 to vector<16x1xi32>
    %21 = arith.select %19, %20, %13 : vector<16x1xi1>, vector<16x1xi32>
    %22 = arith.maxsi %14, %17 : i32
    %c2_i32 = arith.constant 2 : i32
    %23 = arith.addi %0, %c2_i32 : i32
    %24 = arith.index_cast %23 : i32 to index
    %25 = memref.load %arg1[%24] : memref<16xi32, #tpu.memory_space<smem>>
    %c2_i32_5 = arith.constant 2 : i32
    %26 = vector.broadcast %c2_i32_5 : i32 to vector<16x1xi32>
    %27 = arith.cmpi eq, %5, %26 : vector<16x1xi32>
    %28 = vector.broadcast %25 : i32 to vector<16x1xi32>
    %29 = arith.select %27, %28, %21 : vector<16x1xi1>, vector<16x1xi32>
    %30 = arith.maxsi %22, %25 : i32
    %c3_i32 = arith.constant 3 : i32
    %31 = arith.addi %0, %c3_i32 : i32
    %32 = arith.index_cast %31 : i32 to index
    %33 = memref.load %arg1[%32] : memref<16xi32, #tpu.memory_space<smem>>
    %c3_i32_6 = arith.constant 3 : i32
    %34 = vector.broadcast %c3_i32_6 : i32 to vector<16x1xi32>
    %35 = arith.cmpi eq, %5, %34 : vector<16x1xi32>
    %36 = vector.broadcast %33 : i32 to vector<16x1xi32>
    %37 = arith.select %35, %36, %29 : vector<16x1xi1>, vector<16x1xi32>
    %38 = arith.maxsi %30, %33 : i32
    %c4_i32 = arith.constant 4 : i32
    %39 = arith.addi %0, %c4_i32 : i32
    %40 = arith.index_cast %39 : i32 to index
    %41 = memref.load %arg1[%40] : memref<16xi32, #tpu.memory_space<smem>>
    %c4_i32_7 = arith.constant 4 : i32
    %42 = vector.broadcast %c4_i32_7 : i32 to vector<16x1xi32>
    %43 = arith.cmpi eq, %5, %42 : vector<16x1xi32>
    %44 = vector.broadcast %41 : i32 to vector<16x1xi32>
    %45 = arith.select %43, %44, %37 : vector<16x1xi1>, vector<16x1xi32>
    %46 = arith.maxsi %38, %41 : i32
    %c5_i32 = arith.constant 5 : i32
    %47 = arith.addi %0, %c5_i32 : i32
    %48 = arith.index_cast %47 : i32 to index
    %49 = memref.load %arg1[%48] : memref<16xi32, #tpu.memory_space<smem>>
    %c5_i32_8 = arith.constant 5 : i32
    %50 = vector.broadcast %c5_i32_8 : i32 to vector<16x1xi32>
    %51 = arith.cmpi eq, %5, %50 : vector<16x1xi32>
    %52 = vector.broadcast %49 : i32 to vector<16x1xi32>
    %53 = arith.select %51, %52, %45 : vector<16x1xi1>, vector<16x1xi32>
    %54 = arith.maxsi %46, %49 : i32
    %c6_i32 = arith.constant 6 : i32
    %55 = arith.addi %0, %c6_i32 : i32
    %56 = arith.index_cast %55 : i32 to index
    %57 = memref.load %arg1[%56] : memref<16xi32, #tpu.memory_space<smem>>
    %c6_i32_9 = arith.constant 6 : i32
    %58 = vector.broadcast %c6_i32_9 : i32 to vector<16x1xi32>
    %59 = arith.cmpi eq, %5, %58 : vector<16x1xi32>
    %60 = vector.broadcast %57 : i32 to vector<16x1xi32>
    %61 = arith.select %59, %60, %53 : vector<16x1xi1>, vector<16x1xi32>
    %62 = arith.maxsi %54, %57 : i32
    %c7_i32 = arith.constant 7 : i32
    %63 = arith.addi %0, %c7_i32 : i32
    %64 = arith.index_cast %63 : i32 to index
    %65 = memref.load %arg1[%64] : memref<16xi32, #tpu.memory_space<smem>>
    %c7_i32_10 = arith.constant 7 : i32
    %66 = vector.broadcast %c7_i32_10 : i32 to vector<16x1xi32>
    %67 = arith.cmpi eq, %5, %66 : vector<16x1xi32>
    %68 = vector.broadcast %65 : i32 to vector<16x1xi32>
    %69 = arith.select %67, %68, %61 : vector<16x1xi1>, vector<16x1xi32>
    %70 = arith.maxsi %62, %65 : i32
    %c8_i32 = arith.constant 8 : i32
    %71 = arith.addi %0, %c8_i32 : i32
    %72 = arith.index_cast %71 : i32 to index
    %73 = memref.load %arg1[%72] : memref<16xi32, #tpu.memory_space<smem>>
    %c8_i32_11 = arith.constant 8 : i32
    %74 = vector.broadcast %c8_i32_11 : i32 to vector<16x1xi32>
    %75 = arith.cmpi eq, %5, %74 : vector<16x1xi32>
    %76 = vector.broadcast %73 : i32 to vector<16x1xi32>
    %77 = arith.select %75, %76, %69 : vector<16x1xi1>, vector<16x1xi32>
    %78 = arith.maxsi %70, %73 : i32
    %c9_i32 = arith.constant 9 : i32
    %79 = arith.addi %0, %c9_i32 : i32
    %80 = arith.index_cast %79 : i32 to index
    %81 = memref.load %arg1[%80] : memref<16xi32, #tpu.memory_space<smem>>
    %c9_i32_12 = arith.constant 9 : i32
    %82 = vector.broadcast %c9_i32_12 : i32 to vector<16x1xi32>
    %83 = arith.cmpi eq, %5, %82 : vector<16x1xi32>
    %84 = vector.broadcast %81 : i32 to vector<16x1xi32>
    %85 = arith.select %83, %84, %77 : vector<16x1xi1>, vector<16x1xi32>
    %86 = arith.maxsi %78, %81 : i32
    %c10_i32 = arith.constant 10 : i32
    %87 = arith.addi %0, %c10_i32 : i32
    %88 = arith.index_cast %87 : i32 to index
    %89 = memref.load %arg1[%88] : memref<16xi32, #tpu.memory_space<smem>>
    %c10_i32_13 = arith.constant 10 : i32
    %90 = vector.broadcast %c10_i32_13 : i32 to vector<16x1xi32>
    %91 = arith.cmpi eq, %5, %90 : vector<16x1xi32>
    %92 = vector.broadcast %89 : i32 to vector<16x1xi32>
    %93 = arith.select %91, %92, %85 : vector<16x1xi1>, vector<16x1xi32>
    %94 = arith.maxsi %86, %89 : i32
    %c11_i32 = arith.constant 11 : i32
    %95 = arith.addi %0, %c11_i32 : i32
    %96 = arith.index_cast %95 : i32 to index
    %97 = memref.load %arg1[%96] : memref<16xi32, #tpu.memory_space<smem>>
    %c11_i32_14 = arith.constant 11 : i32
    %98 = vector.broadcast %c11_i32_14 : i32 to vector<16x1xi32>
    %99 = arith.cmpi eq, %5, %98 : vector<16x1xi32>
    %100 = vector.broadcast %97 : i32 to vector<16x1xi32>
    %101 = arith.select %99, %100, %93 : vector<16x1xi1>, vector<16x1xi32>
    %102 = arith.maxsi %94, %97 : i32
    %c12_i32 = arith.constant 12 : i32
    %103 = arith.addi %0, %c12_i32 : i32
    %104 = arith.index_cast %103 : i32 to index
    %105 = memref.load %arg1[%104] : memref<16xi32, #tpu.memory_space<smem>>
    %c12_i32_15 = arith.constant 12 : i32
    %106 = vector.broadcast %c12_i32_15 : i32 to vector<16x1xi32>
    %107 = arith.cmpi eq, %5, %106 : vector<16x1xi32>
    %108 = vector.broadcast %105 : i32 to vector<16x1xi32>
    %109 = arith.select %107, %108, %101 : vector<16x1xi1>, vector<16x1xi32>
    %110 = arith.maxsi %102, %105 : i32
    %c13_i32 = arith.constant 13 : i32
    %111 = arith.addi %0, %c13_i32 : i32
    %112 = arith.index_cast %111 : i32 to index
    %113 = memref.load %arg1[%112] : memref<16xi32, #tpu.memory_space<smem>>
    %c13_i32_16 = arith.constant 13 : i32
    %114 = vector.broadcast %c13_i32_16 : i32 to vector<16x1xi32>
    %115 = arith.cmpi eq, %5, %114 : vector<16x1xi32>
    %116 = vector.broadcast %113 : i32 to vector<16x1xi32>
    %117 = arith.select %115, %116, %109 : vector<16x1xi1>, vector<16x1xi32>
    %118 = arith.maxsi %110, %113 : i32
    %c14_i32 = arith.constant 14 : i32
    %119 = arith.addi %0, %c14_i32 : i32
    %120 = arith.index_cast %119 : i32 to index
    %121 = memref.load %arg1[%120] : memref<16xi32, #tpu.memory_space<smem>>
    %c14_i32_17 = arith.constant 14 : i32
    %122 = vector.broadcast %c14_i32_17 : i32 to vector<16x1xi32>
    %123 = arith.cmpi eq, %5, %122 : vector<16x1xi32>
    %124 = vector.broadcast %121 : i32 to vector<16x1xi32>
    %125 = arith.select %123, %124, %117 : vector<16x1xi1>, vector<16x1xi32>
    %126 = arith.maxsi %118, %121 : i32
    %c15_i32 = arith.constant 15 : i32
    %127 = arith.addi %0, %c15_i32 : i32
    %128 = arith.index_cast %127 : i32 to index
    %129 = memref.load %arg1[%128] : memref<16xi32, #tpu.memory_space<smem>>
    %c15_i32_18 = arith.constant 15 : i32
    %130 = vector.broadcast %c15_i32_18 : i32 to vector<16x1xi32>
    %131 = arith.cmpi eq, %5, %130 : vector<16x1xi32>
    %132 = vector.broadcast %129 : i32 to vector<16x1xi32>
    %133 = arith.select %131, %132, %125 : vector<16x1xi1>, vector<16x1xi32>
    %134 = arith.maxsi %126, %129 : i32
    %c16_i32_19 = arith.constant 16 : i32
    %135 = arith.minsi %134, %c16_i32_19 : i32
    %c0 = arith.constant 0 : index
    %c0_20 = arith.constant 0 : index
    %136 = vector.load %arg3[%c0, %c0_20] : memref<16x128xf32, #tpu.memory_space<vmem>>, vector<16x128xf32>
    %c0_21 = arith.constant 0 : index
    %c0_22 = arith.constant 0 : index
    %c0_23 = arith.constant 0 : index
    %137 = vector.load %arg2[%c0_21, %c0_22, %c0_23] : memref<16x16x128xf32, #tpu.memory_space<vmem>>, vector<1x16x128xf32>
    %138 = vector.shape_cast %137 : vector<1x16x128xf32> to vector<16x128xf32>
    %c0_24 = arith.constant 0 : index
    %c0_25 = arith.constant 0 : index
    %139 = vector.load %arg4[%c0_24, %c0_25] : memref<16x128xf32, #tpu.memory_space<vmem>>, vector<16x128xf32>
    %140 = arith.addf %138, %139 : vector<16x128xf32>
    %c1_i32_26 = arith.constant 1 : i32
    %141 = arith.subi %135, %c1_i32_26 : i32
    %142 = arith.addi %c1_i32_26, %141 : i32
    %c1_i32_27 = arith.constant 1 : i32
    %143 = scf.for %arg7 = %c1_i32_26 to %142 step %c1_i32_27 iter_args(%arg8 = %140) -> (vector<16x128xf32>)  : i32 {
      %c1_i32_35 = arith.constant 1 : i32
      %160 = tpu.dynamic_rotate %arg8 by %c1_i32_35 dim 1 : vector<16x128xf32>, i32 -> vector<16x128xf32>
      %161 = arith.select %3, %160, %4 : vector<16x128xi1>, vector<16x128xf32>
      %c2_i32_36 = arith.constant 2 : i32
      %162 = tpu.dynamic_rotate %arg8 by %c2_i32_36 dim 1 : vector<16x128xf32>, i32 -> vector<16x128xf32>
      %163 = arith.addf %162, %136 : vector<16x128xf32>
      %164 = arith.maximumf %arg8, %161 : vector<16x128xf32>
      %165 = arith.maximumf %164, %163 : vector<16x128xf32>
      %166 = arith.subf %arg8, %165 : vector<16x128xf32>
      %167 = math.exp %166 : vector<16x128xf32>
      %168 = arith.subf %161, %165 : vector<16x128xf32>
      %169 = math.exp %168 : vector<16x128xf32>
      %170 = arith.addf %167, %169 : vector<16x128xf32>
      %171 = arith.subf %163, %165 : vector<16x128xf32>
      %172 = math.exp %171 : vector<16x128xf32>
      %173 = arith.addf %170, %172 : vector<16x128xf32>
      %174 = math.log %173 : vector<16x128xf32>
      %175 = arith.addf %165, %174 : vector<16x128xf32>
      %176 = arith.index_cast %arg7 : i32 to index
      %c0_37 = arith.constant 0 : index
      %c0_38 = arith.constant 0 : index
      %177 = vector.load %arg2[%176, %c0_37, %c0_38] : memref<16x16x128xf32, #tpu.memory_space<vmem>>, vector<1x16x128xf32>
      %178 = vector.shape_cast %177 : vector<1x16x128xf32> to vector<16x128xf32>
      %179 = arith.addf %175, %178 : vector<16x128xf32>
      %180 = vector.broadcast %arg7 : i32 to vector<16x1xi32>
      %181 = arith.cmpi slt, %180, %133 : vector<16x1xi32>
      %182 = vector.shape_cast %181 : vector<16x1xi1> to vector<16x1xi1>
      %183 = vector.broadcast %182 : vector<16x1xi1> to vector<16x128xi1>
      %184 = arith.select %183, %179, %arg8 : vector<16x128xi1>, vector<16x128xf32>
      scf.yield %184 : vector<16x128xf32>
    }
    %c0_28 = arith.constant 0 : index
    %c0_29 = arith.constant 0 : index
    %144 = vector.load %arg5[%c0_28, %c0_29] : memref<16x128xf32, #tpu.memory_space<vmem>>, vector<16x128xf32>
    %145 = arith.addf %143, %144 : vector<16x128xf32>
    %cst_30 = arith.constant dense<0xFF800000> : vector<16xf32>
    %146 = vector.multi_reduction <maximumf>, %145, %cst_30 [1] : vector<16x128xf32> to vector<16xf32>
    %147 = vector.shape_cast %146 : vector<16xf32> to vector<16x1xf32>
    %148 = vector.broadcast %147 : vector<16x1xf32> to vector<16x128xf32>
    %149 = arith.subf %145, %148 : vector<16x128xf32>
    %150 = math.exp %149 : vector<16x128xf32>
    %cst_31 = arith.constant dense<0.000000e+00> : vector<16xf32>
    %151 = vector.multi_reduction <add>, %150, %cst_31 [1] : vector<16x128xf32> to vector<16xf32>
    %152 = vector.shape_cast %151 : vector<16xf32> to vector<16x1xf32>
    %153 = math.log %152 : vector<16x1xf32>
    %154 = arith.addf %147, %153 : vector<16x1xf32>
    %cst_32 = arith.constant 0.000000e+00 : f32
    %155 = vector.broadcast %cst_32 : f32 to vector<16x1xf32>
    %156 = arith.subf %155, %154 : vector<16x1xf32>
    %157 = vector.shape_cast %156 : vector<16x1xf32> to vector<16x1xf32>
    %158 = vector.broadcast %157 : vector<16x1xf32> to vector<16x128xf32>
    %c0_33 = arith.constant 0 : index
    %c0_34 = arith.constant 0 : index
    %159 = vector.load %arg6[%c0_33, %c0_34] : memref<16x128xf32, #tpu.memory_space<vmem>>, vector<16x128xf32>
    tpu.vector_store %arg6[%c0_33, %c0_34], %158 {strides = array<i32>} : memref<16x128xf32, #tpu.memory_space<vmem>>, vector<16x128xf32>,
    return
  }
  func.func @transform_0(%arg0: i32, %arg1: memref<16xi32, #tpu.memory_space<smem>>) -> (i32, i32, i32) {
    %c0_i32 = arith.constant 0 : i32
    %c0_i32_0 = arith.constant 0 : i32
    %c0_i32_1 = arith.constant 0 : i32
    return %c0_i32, %arg0, %c0_i32_0 : i32, i32, i32
  }
  func.func @transform_1(%arg0: i32, %arg1: memref<16xi32, #tpu.memory_space<smem>>) -> (i32, i32) {
    %c0_i32 = arith.constant 0 : i32
    %c0_i32_0 = arith.constant 0 : i32
    return %arg0, %c0_i32 : i32, i32
  }
  func.func @transform_2(%arg0: i32, %arg1: memref<16xi32, #tpu.memory_space<smem>>) -> (i32, i32) {
    %c0_i32 = arith.constant 0 : i32
    %c0_i32_0 = arith.constant 0 : i32
    return %arg0, %c0_i32 : i32, i32
  }
  func.func @transform_3(%arg0: i32, %arg1: memref<16xi32, #tpu.memory_space<smem>>) -> (i32, i32) {
    %c0_i32 = arith.constant 0 : i32
    %c0_i32_0 = arith.constant 0 : i32
    return %arg0, %c0_i32 : i32, i32
  }
  func.func @transform_4(%arg0: i32, %arg1: memref<16xi32, #tpu.memory_space<smem>>) -> (i32, i32) {
    %c0_i32 = arith.constant 0 : i32
    %c0_i32_0 = arith.constant 0 : i32
    return %arg0, %c0_i32 : i32, i32
  }
}

</mosaic_0001>

<llo_original>
// kernel: ctc_per_sample_loss.1
$region0: #{ctc_per_sample_loss.1}
  #allocation0 [shape = 'u32[]', space=smem, size = 0x4, offset = 0x4, fixed_abs, tag = 'smem constant byte address 0x4 - core index']
  #allocation1 [shape = 'u32[144,128]{1,0:T(1,128)}', space=vmem, size = 0x12000, scoped, tag = 'internal scratch']
  #allocation2 [shape = 's32[1]{0}', space=sflag, size = 0x4, scoped, tag = 'scoped memory for ctc_per_sample_loss.1']
  #allocation3 [shape = 'u8[512]{0}', space=smem, size = 0x200, scoped, tag = 'prefetched SMEM operand 0']
  %s0 = inlined_call_operand.vmem [shape: s32[16], index: 0, kind: input, shape index: {}]
  %s1 = inlined_call_operand.vmem [shape: f32[16,16,128], index: 1, kind: input, shape index: {}]
  %s2 = inlined_call_operand.vmem [shape: f32[16,128], index: 2, kind: input, shape index: {}]
  %s3 = inlined_call_operand.vmem [shape: f32[16,128], index: 3, kind: input, shape index: {}]
  %s4 = inlined_call_operand.vmem [shape: f32[16,128], index: 4, kind: input, shape index: {}]
  %s5 = inlined_call_operand.vmem [shape: f32[16,128], index: 5, kind: output, shape index: {}]
  %s6 = sld [smem:[#allocation0]]
  $region33: #{ctc_per_sample_loss.1} parent=0
    _
  %s8 = ssub.s32 1, %s6
  %s9 = scalar_select 0, %s8, %s6
  %s10 = sshll.u32 %s0, 4
  %s11 = int_to_ptr.vmem [resolvable:$true] %s10
  %13 = dma.vmem_to_smem %s11, 16, [#allocation3], [#allocation2]
  %14 = dma.done [#allocation2], 16
  %15 = sfence
  // Predicated region
  $region2: #{ctc_per_sample_loss.1} parent=0 // pred_check
    _
  $region3: #{ctc_per_sample_loss.1} parent=0 // pred_check_branch
    %17 = sbr.rel (0) target = $region5
  $region4: #{ctc_per_sample_loss.1} parent=0 // pred_region
    _
  $region5: #{ctc_per_sample_loss.1} parent=0 // pred_fallthru
    _
  // Predicated region
  $region6: #{ctc_per_sample_loss.1} parent=0 // pred_check
    _
  $region7: #{ctc_per_sample_loss.1} parent=0 // pred_check_branch
    %19 = sbr.rel (0) target = $region9
  $region8: #{ctc_per_sample_loss.1} parent=0 // pred_region
    _
  $region9: #{ctc_per_sample_loss.1} parent=0 // pred_fallthru
    _
  // Predicated region
  $region10: #{ctc_per_sample_loss.1} parent=0 // pred_check
    _
  $region11: #{ctc_per_sample_loss.1} parent=0 // pred_check_branch
    %21 = sbr.rel (0) target = $region13
  $region12: #{ctc_per_sample_loss.1} parent=0 // pred_region
    _
  $region13: #{ctc_per_sample_loss.1} parent=0 // pred_fallthru
    _
  // Predicated region
  $region14: #{ctc_per_sample_loss.1} parent=0 // pred_check
    _
  $region15: #{ctc_per_sample_loss.1} parent=0 // pred_check_branch
    %23 = sbr.rel (0) target = $region17
  $region16: #{ctc_per_sample_loss.1} parent=0 // pred_region
    _
  $region17: #{ctc_per_sample_loss.1} parent=0 // pred_fallthru
    _
  %s24 = smul.u32 0, 16
  %v25 = vlaneseq
  %v26 = vand.u32 %v25, 127
  %vm27 = vcmp.ge.s32.totalorder %v26, 1
  %v28 = vlaneseq
  %v29 = vshrl.u32 %v28, 7
  %v30 = vadd.s32 %v29, 8
  %s31 = sld [smem:[#allocation3 + %s24]]
  %vm32 = vcmp.eq.s32.totalorder %v29, 0
  %vm33 = vcmp.eq.s32.totalorder %v30, 0
  %v34 = vstv %s31
  %v35 = vsel %vm32, %v34, 0
  %v36 = vsel %vm33, %v34, 0
  %p37 = scmp.gt.s32.totalorder %s31, 1
  %s38 = scalar_select %p37, %s31, 1
  %s39 = sadd.s32 %s24, 1
  %s40 = sld [smem:[#allocation3 + %s39]]
  %vm41 = vcmp.eq.s32.totalorder %v29, 1
  %vm42 = vcmp.eq.s32.totalorder %v30, 1
  %v43 = vstv %s40
  %v44 = vsel %vm41, %v43, %v35
  %v45 = vsel %vm42, %v43, %v36
  %p46 = scmp.gt.s32.totalorder %s38, %s40
  %s47 = scalar_select %p46, %s38, %s40
  %s48 = sadd.s32 %s24, 2
  %s49 = sld [smem:[#allocation3 + %s48]]
  %vm50 = vcmp.eq.s32.totalorder %v29, 2
  %vm51 = vcmp.eq.s32.totalorder %v30, 2
  %v52 = vstv %s49
  %v53 = vsel %vm50, %v52, %v44
  %v54 = vsel %vm51, %v52, %v45
  %p55 = scmp.gt.s32.totalorder %s47, %s49
  %s56 = scalar_select %p55, %s47, %s49
  %s57 = sadd.s32 %s24, 3
  %s58 = sld [smem:[#allocation3 + %s57]]
  %vm59 = vcmp.eq.s32.totalorder %v29, 3
  %vm60 = vcmp.eq.s32.totalorder %v30, 3
  %v61 = vstv %s58
  %v62 = vsel %vm59, %v61, %v53
  %v63 = vsel %vm60, %v61, %v54
  %p64 = scmp.gt.s32.totalorder %s56, %s58
  %s65 = scalar_select %p64, %s56, %s58
  %s66 = sadd.s32 %s24, 4
  %s67 = sld [smem:[#allocation3 + %s66]]
  %vm68 = vcmp.eq.s32.totalorder %v29, 4
  %vm69 = vcmp.eq.s32.totalorder %v30, 4
  %v70 = vstv %s67
  %v71 = vsel %vm68, %v70, %v62
  %v72 = vsel %vm69, %v70, %v63
  %p73 = scmp.gt.s32.totalorder %s65, %s67
  %s74 = scalar_select %p73, %s65, %s67
  %s75 = sadd.s32 %s24, 5
  %s76 = sld [smem:[#allocation3 + %s75]]
  %vm77 = vcmp.eq.s32.totalorder %v29, 5
  %vm78 = vcmp.eq.s32.totalorder %v30, 5
  %v79 = vstv %s76
  %v80 = vsel %vm77, %v79, %v71
  %v81 = vsel %vm78, %v79, %v72
  %p82 = scmp.gt.s32.totalorder %s74, %s76
  %s83 = scalar_select %p82, %s74, %s76
  %s84 = sadd.s32 %s24, 6
  %s85 = sld [smem:[#allocation3 + %s84]]
  %vm86 = vcmp.eq.s32.totalorder %v29, 6
  %vm87 = vcmp.eq.s32.totalorder %v30, 6
  %v88 = vstv %s85
  %v89 = vsel %vm86, %v88, %v80
  %v90 = vsel %vm87, %v88, %v81
  %p91 = scmp.gt.s32.totalorder %s83, %s85
  %s92 = scalar_select %p91, %s83, %s85
  %s93 = sadd.s32 %s24, 7
  %s94 = sld [smem:[#allocation3 + %s93]]
  %vm95 = vcmp.eq.s32.totalorder %v29, 7
  %vm96 = vcmp.eq.s32.totalorder %v30, 7
  %v97 = vstv %s94
  %v98 = vsel %vm95, %v97, %v89
  %v99 = vsel %vm96, %v97, %v90
  %p100 = scmp.gt.s32.totalorder %s92, %s94
  %s101 = scalar_select %p100, %s92, %s94
  %s102 = sadd.s32 %s24, 8
  %s103 = sld [smem:[#allocation3 + %s102]]
  %vm104 = vcmp.eq.s32.totalorder %v29, 8
  %vm105 = vcmp.eq.s32.totalorder %v30, 8
  %v106 = vstv %s103
  %v107 = vsel %vm104, %v106, %v98
  %v108 = vsel %vm105, %v106, %v99
  %p109 = scmp.gt.s32.totalorder %s101, %s103
  %s110 = scalar_select %p109, %s101, %s103
  %s111 = sadd.s32 %s24, 9
  %s112 = sld [smem:[#allocation3 + %s111]]
  %vm113 = vcmp.eq.s32.totalorder %v29, 9
  %vm114 = vcmp.eq.s32.totalorder %v30, 9
  %v115 = vstv %s112
  %v116 = vsel %vm113, %v115, %v107
  %v117 = vsel %vm114, %v115, %v108
  %p118 = scmp.gt.s32.totalorder %s110, %s112
  %s119 = scalar_select %p118, %s110, %s112
  %s120 = sadd.s32 %s24, 10
  %s121 = sld [smem:[#allocation3 + %s120]]
  %vm122 = vcmp.eq.s32.totalorder %v29, 10
  %vm123 = vcmp.eq.s32.totalorder %v30, 10
  %v124 = vstv %s121
  %v125 = vsel %vm122, %v124, %v116
  %v126 = vsel %vm123, %v124, %v117
  %p127 = scmp.gt.s32.totalorder %s119, %s121
  %s128 = scalar_select %p127, %s119, %s121
  %s129 = sadd.s32 %s24, 11
  %s130 = sld [smem:[#allocation3 + %s129]]
  %vm131 = vcmp.eq.s32.totalorder %v29, 11
  %vm132 = vcmp.eq.s32.totalorder %v30, 11
  %v133 = vstv %s130
  %v134 = vsel %vm131, %v133, %v125
  %v135 = vsel %vm132, %v133, %v126
  %p136 = scmp.gt.s32.totalorder %s128, %s130
  %s137 = scalar_select %p136, %s128, %s130
  %s138 = sadd.s32 %s24, 12
  %s139 = sld [smem:[#allocation3 + %s138]]
  %vm140 = vcmp.eq.s32.totalorder %v29, 12
  %vm141 = vcmp.eq.s32.totalorder %v30, 12
  %v142 = vstv %s139
  %v143 = vsel %vm140, %v142, %v134
  %v144 = vsel %vm141, %v142, %v135
  %p145 = scmp.gt.s32.totalorder %s137, %s139
  %s146 = scalar_select %p145, %s137, %s139
  %s147 = sadd.s32 %s24, 13
  %s148 = sld [smem:[#allocation3 + %s147]]
  %vm149 = vcmp.eq.s32.totalorder %v29, 13
  %vm150 = vcmp.eq.s32.totalorder %v30, 13
  %v151 = vstv %s148
  %v152 = vsel %vm149, %v151, %v143
  %v153 = vsel %vm150, %v151, %v144
  %p154 = scmp.gt.s32.totalorder %s146, %s148
  %s155 = scalar_select %p154, %s146, %s148
  %s156 = sadd.s32 %s24, 14
  %s157 = sld [smem:[#allocation3 + %s156]]
  %vm158 = vcmp.eq.s32.totalorder %v29, 14
  %vm159 = vcmp.eq.s32.totalorder %v30, 14
  %v160 = vstv %s157
  %v161 = vsel %vm158, %v160, %v152
  %v162 = vsel %vm159, %v160, %v153
  %p163 = scmp.gt.s32.totalorder %s155, %s157
  %s164 = scalar_select %p163, %s155, %s157
  %s165 = sadd.s32 %s24, 15
  %s166 = sld [smem:[#allocation3 + %s165]]
  %vm167 = vcmp.eq.s32.totalorder %v29, 15
  %vm168 = vcmp.eq.s32.totalorder %v30, 15
  %v169 = vstv %s166
  %v170 = vsel %vm167, %v169, %v161
  %v171 = vsel %vm168, %v169, %v162
  %p172 = scmp.gt.s32.totalorder %s164, %s166
  %s173 = scalar_select %p172, %s164, %s166
  %p174 = scmp.lt.s32.totalorder %s173, 16
  %s175 = scalar_select %p174, %s173, 16
  %v176 = vld [vmem:[%s2] sm:$0xff]
  %v177 = vld [vmem:[%s2 + $0x8] sm:$0xff]
  %v178 = vld [vmem:[%s1] sm:$0xff]
  %v179 = vld [vmem:[%s1 + $0x8] sm:$0xff]
  %v180 = vld [vmem:[%s3] sm:$0xff]
  %v181 = vld [vmem:[%s3 + $0x8] sm:$0xff]
  %v182 = vadd.f32 %v178, %v180
  %v183 = vadd.f32 %v179, %v181
  // While loop
  $region18: #{ctc_per_sample_loss.1} parent=0 // loop_pre_header
    _
  $region19: #{ctc_per_sample_loss.1} parent=0 // loop_header
    %s185 = sphi 1, %s187
    %p186 = scmp.ge.s32.totalorder %s185, %s175
    %v190 = vphi %v182, %v249
    %v191 = vphi %v183, %v250
  $region20: #{ctc_per_sample_loss.1} parent=0 // loop_header_branch
    %189 = sbr.rel (%p186) target = $region24
  $region21: #{ctc_per_sample_loss.1} parent=0 // loop_body
    %192 = vrot.lane.b32.xlu0 %v190, 1
    %v193 = vpop.permute.xlu0 %192
    %194 = vrot.lane.b32.xlu0 %v191, 1
    %v195 = vpop.permute.xlu0 %194
    %v196 = vsel %vm27, %v193, -1e+30
    %v197 = vsel %vm27, %v195, -1e+30
    %198 = vrot.lane.b32.xlu0 %v190, 2
    %v199 = vpop.permute.xlu0 %198
    %200 = vrot.lane.b32.xlu0 %v191, 2
    %v201 = vpop.permute.xlu0 %200
    %v202 = vadd.f32 %v199, %v176
    %v203 = vadd.f32 %v201, %v177
    %v204 = vmax.f32 %v190, %v196
    %v205 = vmax.f32 %v191, %v197
    %v206 = vmax.f32 %v204, %v202
    %v207 = vmax.f32 %v205, %v203
    %v208 = vsub.f32 %v190, %v206
    %v209 = vsub.f32 %v191, %v207
    %v210 = vmul.f32 %v208, 1.442695
    %v211 = vpow.pop %v210
    %v212 = vmul.f32 %v209, 1.442695
    %v213 = vpow.pop %v212
    %v214 = vsub.f32 %v196, %v206
    %v215 = vsub.f32 %v197, %v207
    %v216 = vmul.f32 %v214, 1.442695
    %v217 = vpow.pop %v216
    %v218 = vmul.f32 %v215, 1.442695
    %v219 = vpow.pop %v218
    %v220 = vadd.f32 %v211, %v217
    %v221 = vadd.f32 %v213, %v219
    %v222 = vsub.f32 %v202, %v206
    %v223 = vsub.f32 %v203, %v207
    %v224 = vmul.f32 %v222, 1.442695
    %v225 = vpow.pop %v224
    %v226 = vmul.f32 %v223, 1.442695
    %v227 = vpow.pop %v226
    %v228 = vadd.f32 %v220, %v225
    %v229 = vadd.f32 %v221, %v227
    %v230 = vlog2.pop %v228
    %v231 = vmul.f32 %v230, 0.6931472
    %v232 = vlog2.pop %v229
    %v233 = vmul.f32 %v232, 0.6931472
    %v234 = vadd.f32 %v206, %v231
    %v235 = vadd.f32 %v207, %v233
    %s236 = smul.u32 %s185, 16
    %s237 = scalar_lea.vmem %s1, %s236
    %v238 = vld [vmem:[%s237] sm:$0xff]
    %v239 = vld [vmem:[%s237 + $0x8] sm:$0xff]
    %v240 = vadd.f32 %v234, %v238
    %v241 = vadd.f32 %v235, %v239
    %v242 = vstv %s185
    %vm243 = vcmp.lt.s32.totalorder %v242, %v170
    %vm244 = vcmp.lt.s32.totalorder %v242, %v171
    %v245 = vsel %vm243, 1, 0
    %v246 = vsel %vm244, 1, 0
    %vm247 = vcmp.eq.s32.totalorder %v245, 1
    %vm248 = vcmp.eq.s32.totalorder %v246, 1
    %v249 = vsel %vm247, %v240, %v190
    %v250 = vsel %vm248, %v241, %v191
  $region22: #{ctc_per_sample_loss.1} parent=0 // loop_footer
    %s187 = sadd.s32 %s185, 1
  $region23: #{ctc_per_sample_loss.1} parent=0 // loop_footer_branch
    %184 = sbr.rel target = $region19
  $region24: #{ctc_per_sample_loss.1} parent=0 // loop_exit
    _
  %v251 = vld [vmem:[%s4] sm:$0xff]
  %v252 = vld [vmem:[%s4 + $0x8] sm:$0xff]
  %v253 = vadd.f32 %v190, %v251
  %v254 = vadd.f32 %v191, %v252
  %255 = vmax.xlane.f32.xlu0 %v253
  %v256 = vpop.xlane.xlu0 %255
  %257 = vmax.xlane.f32.xlu0 %v254
  %v258 = vpop.xlane.xlu0 %257
  %v259 = vsub.f32 %v253, %v256
  %v260 = vsub.f32 %v254, %v258
  %v261 = vmul.f32 %v259, 1.442695
  %v262 = vpow.pop %v261
  %v263 = vmul.f32 %v260, 1.442695
  %v264 = vpow.pop %v263
  %265 = vadd.xlane.f32.xlu0 %v262
  %v266 = vpop.xlane.xlu0 %265
  %267 = vadd.xlane.f32.xlu0 %v264
  %v268 = vpop.xlane.xlu0 %267
  %v269 = vlog2.pop %v266
  %v270 = vmul.f32 %v269, 0.6931472
  %v271 = vlog2.pop %v268
  %v272 = vmul.f32 %v271, 0.6931472
  %v273 = vadd.f32 %v256, %v270
  %v274 = vadd.f32 %v258, %v272
  %v275 = vsub.f32 0.0, %v273
  %v276 = vsub.f32 0.0, %v274
  %277 = vst [vmem:[%s5] sm:$0xff] %v275
  %278 = vst [vmem:[%s5 + $0x8] sm:$0xff] %v276
  // Predicated region
  $region25: #{ctc_per_sample_loss.1} parent=0 // pred_check
    _
  $region26: #{ctc_per_sample_loss.1} parent=0 // pred_check_branch
    %280 = sbr.rel (0) target = $region28
  $region27: #{ctc_per_sample_loss.1} parent=0 // pred_region
    _
  $region28: #{ctc_per_sample_loss.1} parent=0 // pred_fallthru
    _
  // Predicated region
  $region29: #{ctc_per_sample_loss.1} parent=0 // pred_check
    _
  $region30: #{ctc_per_sample_loss.1} parent=0 // pred_check_branch
    %282 = sbr.rel (0) target = $region32
  $region31: #{ctc_per_sample_loss.1} parent=0 // pred_region
    _
  $region32: #{ctc_per_sample_loss.1} parent=0 // pred_fallthru
    _

</llo_original>
